<compile_context>
chip_gen: v5e
topology: v5e:2x2
jax: 0.10.0
libtpu: 0.0.40
codegen_flags: <defaults>
</compile_context>

<pallas_src>
import jax
import jax.numpy as jnp
from jax.experimental import pallas as pl
from jax.experimental.pallas import tpu as pltpu

HIDDEN_SIZE1 = 128
HIDDEN_SIZE2 = 128


def actor_fwd_kernel(x_ref, w1_ref, b1_ref, w2_ref, b2_ref, w3_ref, b3_ref, out_ref):
    # Layer 1: Linear + ReLU  (bf16 MXU operands, f32 accumulate, f32 VPU ReLU)
    x = x_ref[...]                                                   # bf16 (TB, in_pad)
    h1 = jnp.dot(x, w1_ref[...], preferred_element_type=jnp.float32) + b1_ref[...]
    h1 = jnp.maximum(h1, 0.0)
    # Layer 2: Linear + ReLU
    h2 = jnp.dot(h1.astype(jnp.bfloat16), w2_ref[...],
                 preferred_element_type=jnp.float32) + b2_ref[...]
    h2 = jnp.maximum(h2, 0.0)
    # Layer 3: Linear (logits, no activation) -> lane-dense (TB, 128) store
    out_ref[...] = jnp.dot(h2.astype(jnp.bfloat16), w3_ref[...],
                           preferred_element_type=jnp.float32) + b3_ref[...]


def _round_up(x, m):
    return ((x + m - 1) // m) * m


def actor_forward(state, params, *, tile_batch=512):
    """Fused 3-layer MLP forward.  state: (B, input_size) f32 -> (B, output_size) f32."""
    w1, b1, w2, b2, w3, b3 = params          # f32, weights stored (in_features, out_features)
    B, in_size = state.shape
    out_size = w3.shape[1]
    h1, h2 = w1.shape[1], w2.shape[1]

    # --- padding / tiling geometry -------------------------------------------------
    in_pad = _round_up(max(in_size, 8), 8)           # sublane-align first matmul
    out_pad = _round_up(out_size, 128)               # lane-dense output stores
    B8 = _round_up(B, 8)
    TB = min(_round_up(tile_batch, 8), B8)           # batch tile (rows per grid step)
    B_pad = _round_up(B8, TB)
    n_tiles = B_pad // TB

    # --- padded / bf16-cast operands (zero padding keeps the math exact) -----------
    x_p = jnp.zeros((B_pad, in_pad), jnp.bfloat16).at[:B, :in_size].set(
        state.astype(jnp.bfloat16))
    w1_p = jnp.zeros((in_pad, h1), jnp.bfloat16).at[:in_size, :].set(
        w1.astype(jnp.bfloat16))
    w2_p = w2.astype(jnp.bfloat16)
    w3_p = jnp.zeros((h2, out_pad), jnp.bfloat16).at[:, :out_size].set(
        w3.astype(jnp.bfloat16))
    b1_p = b1.astype(jnp.float32)
    b2_p = b2.astype(jnp.float32)
    b3_p = jnp.zeros((1, out_pad), jnp.float32).at[:, :out_size].set(b3)

    const = lambda i: (0, 0)                          # weights/biases stay VMEM-resident
    flops = 2 * B_pad * (in_pad * h1 + h1 * h2 + h2 * out_pad)
    bytes_accessed = (x_p.size * 2 + w1_p.size * 2 + w2_p.size * 2 + w3_p.size * 2
                      + (b1_p.size + b2_p.size + b3_p.size) * 4
                      + B_pad * out_pad * 4)

    out_padded = pl.pallas_call(
        actor_fwd_kernel,
        out_shape=jax.ShapeDtypeStruct((B_pad, out_pad), jnp.float32),
        grid=(n_tiles,),
        in_specs=[
            pl.BlockSpec((TB, in_pad), lambda i: (i, 0)),     # state tile (pipelined)
            pl.BlockSpec((in_pad, h1), const),                # w1
            pl.BlockSpec((1, h1), const),                     # b1
            pl.BlockSpec((h1, h2), const),                    # w2
            pl.BlockSpec((1, h2), const),                     # b2
            pl.BlockSpec((h2, out_pad), const),               # w3 (padded)
            pl.BlockSpec((1, out_pad), const),                # b3 (padded)
        ],
        out_specs=pl.BlockSpec((TB, out_pad), lambda i: (i, 0)),
        compiler_params=pltpu.CompilerParams(
            dimension_semantics=("parallel",)),
        cost_estimate=pl.CostEstimate(
            flops=flops, transcendentals=0, bytes_accessed=bytes_accessed),
    )(x_p, w1_p, b1_p, w2_p, b2_p, w3_p, b3_p)

    return out_padded[:B, :out_size]


def init_actor_params(key, input_size, output_size):
    """Deterministic init mirroring torch.nn.Linear's U(-1/sqrt(fan_in), +1/sqrt(fan_in))."""
    keys = jax.random.split(key, 6)

    def linear(kw, kb, fan_in, fan_out):
        bound = 1.0 / jnp.sqrt(jnp.float32(fan_in))
        # stored as (in, out) so the kernel does x @ W (== PyTorch x @ W.T + b)
        w = jax.random.uniform(kw, (fan_in, fan_out), jnp.float32, -bound, bound)
        b = jax.random.uniform(kb, (1, fan_out), jnp.float32, -bound, bound)
        return w, b

    w1, b1 = linear(keys[0], keys[1], input_size, HIDDEN_SIZE1)
    w2, b2 = linear(keys[2], keys[3], HIDDEN_SIZE1, HIDDEN_SIZE2)
    w3, b3 = linear(keys[4], keys[5], HIDDEN_SIZE2, output_size)
    return (w1, b1, w2, b2, w3, b3)


def actor_forward_ref_f32(state, params):
    """Plain-JAX f32 reference (PyTorch semantics)."""
    w1, b1, w2, b2, w3, b3 = params
    h1 = jnp.maximum(state @ w1 + b1, 0.0)
    h2 = jnp.maximum(h1 @ w2 + b2, 0.0)
    return h2 @ w3 + b3


def actor_forward_ref_bf16(state, params):
    """Plain-JAX reference with the same bf16-operand / f32-accumulate precision."""
    w1, b1, w2, b2, w3, b3 = params
    bf = jnp.bfloat16
    h1 = jnp.maximum(
        jnp.dot(state.astype(bf), w1.astype(bf), preferred_element_type=jnp.float32) + b1, 0.0)
    h2 = jnp.maximum(
        jnp.dot(h1.astype(bf), w2.astype(bf), preferred_element_type=jnp.float32) + b2, 0.0)
    return jnp.dot(h2.astype(bf), w3.astype(bf), preferred_element_type=jnp.float32) + b3


if __name__ == "__main__":
    key = jax.random.PRNGKey(0)
    k_params, k_state, k_big = jax.random.split(key, 3)

    batch = 8          # small batch of states
    input_size = 4     # e.g. CartPole observation dim
    output_size = 2    # e.g. CartPole action dim

    params = init_actor_params(k_params, input_size, output_size)

    # --- small batch (single grid step) -------------------------------------------
    state = jax.random.normal(k_state, (batch, input_size), jnp.float32)
    logits = jax.block_until_ready(actor_forward(state, params))
    assert logits.shape == (batch, output_size)
    ref_bf16 = actor_forward_ref_bf16(state, params)
    ref_f32 = actor_forward_ref_f32(state, params)
    assert jnp.allclose(logits, ref_bf16, atol=1e-3, rtol=1e-3), "mismatch vs bf16 reference"
    assert jnp.allclose(logits, ref_f32, atol=5e-2, rtol=5e-2), "mismatch vs f32 reference"

    # --- larger rollout batch (exercises the multi-step / parallel batch grid) -----
    big_batch = 1024
    big_state = jax.random.normal(k_big, (big_batch, input_size), jnp.float32)
    big_logits = jax.block_until_ready(actor_forward(big_state, params))
    assert big_logits.shape == (big_batch, output_size)
    big_ref = actor_forward_ref_bf16(big_state, params)
    assert jnp.allclose(big_logits, big_ref, atol=1e-3, rtol=1e-3), "mismatch (batched) vs bf16 ref"

    # TODO(synk): Categorical sampling / backward (REINFORCE return computation, Adam)
    # are host/training-time logic, not part of the module's forward pass, so they are
    # not kernelized.
    print("KERNEL_OK")
</pallas_src>

<mosaic_0001>
module attributes {stable_mosaic.version = 11 : i64} {
  func.func @actor_fwd_kernel(%arg0: i32, %arg1: memref<8x8xbf16, #tpu.memory_space<vmem>>, %arg2: memref<8x128xbf16, #tpu.memory_space<vmem>>, %arg3: memref<1x128xf32, #tpu.memory_space<vmem>>, %arg4: memref<128x128xbf16, #tpu.memory_space<vmem>>, %arg5: memref<1x128xf32, #tpu.memory_space<vmem>>, %arg6: memref<128x128xbf16, #tpu.memory_space<vmem>>, %arg7: memref<1x128xf32, #tpu.memory_space<vmem>>, %arg8: memref<8x128xf32, #tpu.memory_space<vmem>>) attributes {dimension_semantics = [#tpu.dimension_semantics<parallel>], iteration_bounds = array<i64: 1>, scalar_prefetch = 0 : i64, scratch_operands = 0 : i64, tpu.core_type = #tpu.core_type<tc>, window_params = [{transform_indices = @transform_0, window_bounds = array<i64: 8, 8>}, {pipeline_mode = #tpu.pipeline_mode<synchronous>, transform_indices = @transform_1, window_bounds = array<i64: 8, 128>}, {pipeline_mode = #tpu.pipeline_mode<synchronous>, transform_indices = @transform_2, window_bounds = array<i64: 1, 128>}, {pipeline_mode = #tpu.pipeline_mode<synchronous>, transform_indices = @transform_3, window_bounds = array<i64: 128, 128>}, {pipeline_mode = #tpu.pipeline_mode<synchronous>, transform_indices = @transform_4, window_bounds = array<i64: 1, 128>}, {pipeline_mode = #tpu.pipeline_mode<synchronous>, transform_indices = @transform_5, window_bounds = array<i64: 128, 128>}, {pipeline_mode = #tpu.pipeline_mode<synchronous>, transform_indices = @transform_6, window_bounds = array<i64: 1, 128>}, {transform_indices = @transform_7, window_bounds = array<i64: 8, 128>}]} {
    %c0 = arith.constant 0 : index
    %c0_0 = arith.constant 0 : index
    %0 = vector.load %arg1[%c0, %c0_0] : memref<8x8xbf16, #tpu.memory_space<vmem>>, vector<8x8xbf16>
    %c0_1 = arith.constant 0 : index
    %c0_2 = arith.constant 0 : index
    %1 = vector.load %arg2[%c0_1, %c0_2] : memref<8x128xbf16, #tpu.memory_space<vmem>>, vector<8x128xbf16>
    %cst = arith.constant dense<0.000000e+00> : vector<8x128xf32>
    %2 = tpu.matmul %0, %1, %cst {dimension_numbers = #tpu.dot_dimension_numbers<[1], [0], [0], [1], [0, 0, 1, 1], [], []>} : vector<8x8xbf16>, vector<8x128xbf16>, vector<8x128xf32> -> vector<8x128xf32>
    %c0_3 = arith.constant 0 : index
    %c0_4 = arith.constant 0 : index
    %3 = vector.load %arg3[%c0_3, %c0_4] : memref<1x128xf32, #tpu.memory_space<vmem>>, vector<1x128xf32>
    %4 = vector.broadcast %3 : vector<1x128xf32> to vector<8x128xf32>
    %5 = arith.addf %2, %4 : vector<8x128xf32>
    %cst_5 = arith.constant 0.000000e+00 : f32
    %6 = vector.broadcast %cst_5 : f32 to vector<8x128xf32>
    %7 = arith.maximumf %5, %6 : vector<8x128xf32>
    %8 = arith.truncf %7 : vector<8x128xf32> to vector<8x128xbf16>
    %c0_6 = arith.constant 0 : index
    %c0_7 = arith.constant 0 : index
    %9 = vector.load %arg4[%c0_6, %c0_7] : memref<128x128xbf16, #tpu.memory_space<vmem>>, vector<128x128xbf16>
    %cst_8 = arith.constant dense<0.000000e+00> : vector<8x128xf32>
    %10 = tpu.matmul %8, %9, %cst_8 {dimension_numbers = #tpu.dot_dimension_numbers<[1], [0], [0], [1], [0, 0, 1, 1], [], []>} : vector<8x128xbf16>, vector<128x128xbf16>, vector<8x128xf32> -> vector<8x128xf32>
    %c0_9 = arith.constant 0 : index
    %c0_10 = arith.constant 0 : index
    %11 = vector.load %arg5[%c0_9, %c0_10] : memref<1x128xf32, #tpu.memory_space<vmem>>, vector<1x128xf32>
    %12 = vector.broadcast %11 : vector<1x128xf32> to vector<8x128xf32>
    %13 = arith.addf %10, %12 : vector<8x128xf32>
    %cst_11 = arith.constant 0.000000e+00 : f32
    %14 = vector.broadcast %cst_11 : f32 to vector<8x128xf32>
    %15 = arith.maximumf %13, %14 : vector<8x128xf32>
    %16 = arith.truncf %15 : vector<8x128xf32> to vector<8x128xbf16>
    %c0_12 = arith.constant 0 : index
    %c0_13 = arith.constant 0 : index
    %17 = vector.load %arg6[%c0_12, %c0_13] : memref<128x128xbf16, #tpu.memory_space<vmem>>, vector<128x128xbf16>
    %cst_14 = arith.constant dense<0.000000e+00> : vector<8x128xf32>
    %18 = tpu.matmul %16, %17, %cst_14 {dimension_numbers = #tpu.dot_dimension_numbers<[1], [0], [0], [1], [0, 0, 1, 1], [], []>} : vector<8x128xbf16>, vector<128x128xbf16>, vector<8x128xf32> -> vector<8x128xf32>
    %c0_15 = arith.constant 0 : index
    %c0_16 = arith.constant 0 : index
    %19 = vector.load %arg7[%c0_15, %c0_16] : memref<1x128xf32, #tpu.memory_space<vmem>>, vector<1x128xf32>
    %20 = vector.broadcast %19 : vector<1x128xf32> to vector<8x128xf32>
    %21 = arith.addf %18, %20 : vector<8x128xf32>
    %c0_17 = arith.constant 0 : index
    %c0_18 = arith.constant 0 : index
    %22 = vector.load %arg8[%c0_17, %c0_18] : memref<8x128xf32, #tpu.memory_space<vmem>>, vector<8x128xf32>
    tpu.vector_store %arg8[%c0_17, %c0_18], %21 {strides = array<i32>} : memref<8x128xf32, #tpu.memory_space<vmem>>, vector<8x128xf32>,
    return
  }
  func.func @transform_0(%arg0: i32) -> (i32, i32) {
    %c0_i32 = arith.constant 0 : i32
    %c0_i32_0 = arith.constant 0 : i32
    return %arg0, %c0_i32 : i32, i32
  }
  func.func @transform_1(%arg0: i32) -> (i32, i32) {
    %c0_i32 = arith.constant 0 : i32
    %c0_i32_0 = arith.constant 0 : i32
    %c0_i32_1 = arith.constant 0 : i32
    return %c0_i32, %c0_i32_0 : i32, i32
  }
  func.func @transform_2(%arg0: i32) -> (i32, i32) {
    %c0_i32 = arith.constant 0 : i32
    %c0_i32_0 = arith.constant 0 : i32
    %c0_i32_1 = arith.constant 0 : i32
    return %c0_i32, %c0_i32_0 : i32, i32
  }
  func.func @transform_3(%arg0: i32) -> (i32, i32) {
    %c0_i32 = arith.constant 0 : i32
    %c0_i32_0 = arith.constant 0 : i32
    %c0_i32_1 = arith.constant 0 : i32
    return %c0_i32, %c0_i32_0 : i32, i32
  }
  func.func @transform_4(%arg0: i32) -> (i32, i32) {
    %c0_i32 = arith.constant 0 : i32
    %c0_i32_0 = arith.constant 0 : i32
    %c0_i32_1 = arith.constant 0 : i32
    return %c0_i32, %c0_i32_0 : i32, i32
  }
  func.func @transform_5(%arg0: i32) -> (i32, i32) {
    %c0_i32 = arith.constant 0 : i32
    %c0_i32_0 = arith.constant 0 : i32
    %c0_i32_1 = arith.constant 0 : i32
    return %c0_i32, %c0_i32_0 : i32, i32
  }
  func.func @transform_6(%arg0: i32) -> (i32, i32) {
    %c0_i32 = arith.constant 0 : i32
    %c0_i32_0 = arith.constant 0 : i32
    %c0_i32_1 = arith.constant 0 : i32
    return %c0_i32, %c0_i32_0 : i32, i32
  }
  func.func @transform_7(%arg0: i32) -> (i32, i32) {
    %c0_i32 = arith.constant 0 : i32
    %c0_i32_0 = arith.constant 0 : i32
    return %arg0, %c0_i32 : i32, i32
  }
}

</mosaic_0001>

<llo_original>
// kernel: tpu_custom_call.1
$region0: #{tpu_custom_call.1}
  #allocation0 [shape = 'u32[]', space=smem, size = 0x4, offset = 0x4, fixed_abs, tag = 'smem constant byte address 0x4 - core index']
  #allocation1 [shape = 'u32[72,128]{1,0:T(1,128)}', space=vmem, size = 0x9000, scoped, tag = 'internal scratch']
  %s0 = inlined_call_operand.hbm [shape: bf16[8,8], index: 0, kind: input, shape index: {}]
  %s1 = inlined_call_operand.hbm [shape: bf16[8,128], index: 1, kind: input, shape index: {}]
  %s2 = inlined_call_operand.vmem [shape: f32[1,128], index: 2, kind: input, shape index: {}]
  %s3 = inlined_call_operand.hbm [shape: bf16[128,128], index: 3, kind: input, shape index: {}]
  %s4 = inlined_call_operand.vmem [shape: f32[1,128], index: 4, kind: input, shape index: {}]
  %s5 = inlined_call_operand.hbm [shape: bf16[128,128], index: 5, kind: input, shape index: {}]
  %s6 = inlined_call_operand.vmem [shape: f32[1,128], index: 6, kind: input, shape index: {}]
  %s7 = inlined_call_operand.hbm [shape: f32[8,128], index: 7, kind: output, shape index: {}]
  %s8 = sld [smem:[#allocation0]]
  $region54: #{tpu_custom_call.1} parent=0
    _
  %s10 = ssub.s32 1, %s8
  %s11 = scalar_select 0, %s10, %s8
  $region1: #{tpu_custom_call.1} parent=0
    #allocation2 [shape = 'u8[2048]{0}', space=vmem, size = 0x800, scoped, tag = 'input window, operand 0, single buffered']
    #allocation3 [shape = 's32[1]{0}', space=sflag, size = 0x4, scoped, tag = 'scoped memory for tpu_custom_call.1']
    #allocation4 [shape = 's32[1]{0}', space=sflag, size = 0x4, scoped, tag = 'scoped memory for tpu_custom_call.1']
    #allocation5 [shape = 'u8[2048]{0}', space=vmem, size = 0x800, scoped, tag = 'input window, operand 1, single buffered']
    #allocation6 [shape = 's32[1]{0}', space=sflag, size = 0x4, scoped, tag = 'scoped memory for tpu_custom_call.1']
    #allocation7 [shape = 'u8[32768]{0}', space=vmem, size = 0x8000, scoped, tag = 'input window, operand 3, single buffered']
    #allocation8 [shape = 'u8[32768]{0}', space=vmem, size = 0x8000, scoped, tag = 'input window, operand 5, single buffered']
    #allocation9 [shape = 's32[1]{0}', space=sflag, size = 0x4, scoped, tag = 'scoped memory for tpu_custom_call.1']
    #allocation10 [shape = 'u8[4096]{0}', space=vmem, size = 0x1000, scoped, tag = 'output window, operand 0, single buffered']
    %12 = vsyncpa [#allocation3], 0
    %13 = vsyncpa [#allocation6], 0
    %14 = vsyncpa [#allocation9], 0
    %15 = vsyncpa [#allocation4], 0
    // Predicated region
    $region2: #{tpu_custom_call.1} parent=1 // pred_check
      _
    $region3: #{tpu_custom_call.1} parent=1 // pred_check_branch
      %17 = sbr.rel (0) target = $region5
    $region4: #{tpu_custom_call.1} parent=1 // pred_region
      %19 = vsyncadd [#allocation3], 0
      %s21 = sshll.u32 %s0, 4
      %s22 = int_to_ptr.hbm [resolvable:$true] %s21
      %s23 = sshll.u32 [#allocation2], 4
      %s24 = int_to_ptr.vmem [resolvable:$true] %s23
      %26 = dma.hbm_to_vmem [thread:$0]  %s22, 64, %s24, [#allocation3]
    $region5: #{tpu_custom_call.1} parent=1 // pred_fallthru
      _
    // Predicated region
    $region6: #{tpu_custom_call.1} parent=1 // pred_check
      _
    $region7: #{tpu_custom_call.1} parent=1 // pred_check_branch
      %28 = sbr.rel (0) target = $region9
    $region8: #{tpu_custom_call.1} parent=1 // pred_region
      %30 = vsyncadd [#allocation6], 0
      %s32 = sshll.u32 %s1, 4
      %s33 = int_to_ptr.hbm [resolvable:$true] %s32
      %s34 = sshll.u32 [#allocation5], 4
      %s35 = int_to_ptr.vmem [resolvable:$true] %s34
      %37 = dma.hbm_to_vmem [thread:$0]  %s33, 64, %s35, [#allocation6]
    $region9: #{tpu_custom_call.1} parent=1 // pred_fallthru
      _
    // Predicated region
    $region10: #{tpu_custom_call.1} parent=1 // pred_check
      _
    $region11: #{tpu_custom_call.1} parent=1 // pred_check_branch
      %39 = sbr.rel (0) target = $region13
    $region12: #{tpu_custom_call.1} parent=1 // pred_region
      _
    $region13: #{tpu_custom_call.1} parent=1 // pred_fallthru
      _
    // Predicated region
    $region14: #{tpu_custom_call.1} parent=1 // pred_check
      _
    $region15: #{tpu_custom_call.1} parent=1 // pred_check_branch
      %41 = sbr.rel (0) target = $region17
    $region16: #{tpu_custom_call.1} parent=1 // pred_region
      %43 = vsyncadd [#allocation6], 0
      %s44 = sshll.u32 %s3, 4
      %s45 = int_to_ptr.hbm [resolvable:$true] %s44
      %s46 = sshll.u32 [#allocation7], 4
      %s47 = int_to_ptr.vmem [resolvable:$true] %s46
      %52 = dma.hbm_to_vmem [thread:$0]  %s45, 1024, %s47, [#allocation6], 64, 64, 4
    $region17: #{tpu_custom_call.1} parent=1 // pred_fallthru
      _
    // Predicated region
    $region18: #{tpu_custom_call.1} parent=1 // pred_check
      _
    $region19: #{tpu_custom_call.1} parent=1 // pred_check_branch
      %54 = sbr.rel (0) target = $region21
    $region20: #{tpu_custom_call.1} parent=1 // pred_region
      _
    $region21: #{tpu_custom_call.1} parent=1 // pred_fallthru
      _
    // Predicated region
    $region22: #{tpu_custom_call.1} parent=1 // pred_check
      _
    $region23: #{tpu_custom_call.1} parent=1 // pred_check_branch
      %56 = sbr.rel (0) target = $region25
    $region24: #{tpu_custom_call.1} parent=1 // pred_region
      %58 = vsyncadd [#allocation9], 0
      %s59 = sshll.u32 %s5, 4
      %s60 = int_to_ptr.hbm [resolvable:$true] %s59
      %s61 = sshll.u32 [#allocation8], 4
      %s62 = int_to_ptr.vmem [resolvable:$true] %s61
      %67 = dma.hbm_to_vmem [thread:$0]  %s60, 1024, %s62, [#allocation9], 64, 64, 4
    $region25: #{tpu_custom_call.1} parent=1 // pred_fallthru
      _
    // Predicated region
    $region26: #{tpu_custom_call.1} parent=1 // pred_check
      _
    $region27: #{tpu_custom_call.1} parent=1 // pred_check_branch
      %69 = sbr.rel (0) target = $region29
    $region28: #{tpu_custom_call.1} parent=1 // pred_region
      _
    $region29: #{tpu_custom_call.1} parent=1 // pred_fallthru
      _
    // Predicated region
    $region30: #{tpu_custom_call.1} parent=1 // pred_check
      _
    $region31: #{tpu_custom_call.1} parent=1 // pred_check_branch
      %71 = sbr.rel (0) target = $region33
    $region32: #{tpu_custom_call.1} parent=1 // pred_region
      %73 = dma.done [#allocation3], 64
    $region33: #{tpu_custom_call.1} parent=1 // pred_fallthru
      _
    // Predicated region
    $region34: #{tpu_custom_call.1} parent=1 // pred_check
      _
    $region35: #{tpu_custom_call.1} parent=1 // pred_check_branch
      %75 = sbr.rel (0) target = $region37
    $region36: #{tpu_custom_call.1} parent=1 // pred_region
      %77 = dma.done [#allocation6], 64
    $region37: #{tpu_custom_call.1} parent=1 // pred_fallthru
      _
    // Predicated region
    $region38: #{tpu_custom_call.1} parent=1 // pred_check
      _
    $region39: #{tpu_custom_call.1} parent=1 // pred_check_branch
      %79 = sbr.rel (0) target = $region41
    $region40: #{tpu_custom_call.1} parent=1 // pred_region
      %81 = dma.done [#allocation6], 1024
    $region41: #{tpu_custom_call.1} parent=1 // pred_fallthru
      _
    // Predicated region
    $region42: #{tpu_custom_call.1} parent=1 // pred_check
      _
    $region43: #{tpu_custom_call.1} parent=1 // pred_check_branch
      %83 = sbr.rel (0) target = $region45
    $region44: #{tpu_custom_call.1} parent=1 // pred_region
      %85 = dma.done [#allocation9], 1024
    $region45: #{tpu_custom_call.1} parent=1 // pred_fallthru
      _
    %v87 = vld [vmem:[#allocation2] sm:$0xf]
    %v88 = vld [vmem:[#allocation5] sm:$0xf]
    %v89 = vld [vmem:[%s2] sm:$0x1]
    %v91 = vperm.slane %v89, 0
    %vm93 = vcmask 64512
    %v95 = vsel %vm93, %v87, 0
    %vm97 = vcmask 1043456
    %v99 = vsel %vm97, %v88, 0
    %101 = vmatpush.bf16.msra.mxu0 0
    %102 = vmatpush.bf16.msra.mxu0 0
    %103 = vmatpush.bf16.msra.mxu0 0
    %104 = vmatpush.bf16.msra.mxu0 0
    %105 = vmatpush.bf16.msra.mxu0 0
    %106 = vmatpush.bf16.msra.mxu0 0
    %107 = vmatpush.bf16.msra.mxu0 0
    %108 = vmatpush.bf16.msra.mxu0 %v99
    %109 = vmatmul.bf16.gmra.mxu0 %v95
    %v110 = vpop.f32.mrf.mxu0
    %v111 = vadd.f32 %v91, %v110
    %v112 = vpop.f32.mrf.mxu0
    %113 = vdwg.mxu0
    %v114 = vmax.f32 %v111, 0.0
    %v115 = vpack.c.bf16 %v114, %v114
    %v116 = vld [vmem:[#allocation7] sm:$0xf]
    %v117 = vld [vmem:[#allocation7 + $0x4] sm:$0xf]
    %v118 = vld [vmem:[#allocation7 + $0x8] sm:$0xf]
    %v119 = vld [vmem:[#allocation7 + $0xc] sm:$0xf]
    %v120 = vld [vmem:[#allocation7 + $0x10] sm:$0xf]
    %v121 = vld [vmem:[#allocation7 + $0x14] sm:$0xf]
    %v122 = vld [vmem:[#allocation7 + $0x18] sm:$0xf]
    %v123 = vld [vmem:[#allocation7 + $0x1c] sm:$0xf]
    %v124 = vld [vmem:[#allocation7 + $0x20] sm:$0xf]
    %v125 = vld [vmem:[#allocation7 + $0x24] sm:$0xf]
    %v126 = vld [vmem:[#allocation7 + $0x28] sm:$0xf]
    %v127 = vld [vmem:[#allocation7 + $0x2c] sm:$0xf]
    %v128 = vld [vmem:[#allocation7 + $0x30] sm:$0xf]
    %v129 = vld [vmem:[#allocation7 + $0x34] sm:$0xf]
    %v130 = vld [vmem:[#allocation7 + $0x38] sm:$0xf]
    %v131 = vld [vmem:[#allocation7 + $0x3c] sm:$0xf]
    %v132 = vld [vmem:[%s4] sm:$0x1]
    %v134 = vperm.slane %v132, 0
    %v152 = vunpack.c.l.b16 %v116
    %v153 = vunpack.c.l.b16 %v117
    %v154 = vunpack.c.l.b16 %v118
    %v155 = vunpack.c.l.b16 %v119
    %v156 = vunpack.c.l.b16 %v120
    %v157 = vunpack.c.l.b16 %v121
    %v158 = vunpack.c.l.b16 %v122
    %v159 = vunpack.c.l.b16 %v123
    %v160 = vunpack.c.l.b16 %v124
    %v161 = vunpack.c.l.b16 %v125
    %v162 = vunpack.c.l.b16 %v126
    %v163 = vunpack.c.l.b16 %v127
    %v164 = vunpack.c.l.b16 %v128
    %v165 = vunpack.c.l.b16 %v129
    %v166 = vunpack.c.l.b16 %v130
    %v167 = vunpack.c.l.b16 %v131
    %v168 = vpack.c.b16 %v153, %v152
    %v169 = vpack.c.b16 %v155, %v154
    %v170 = vpack.c.b16 %v157, %v156
    %v171 = vpack.c.b16 %v159, %v158
    %v172 = vpack.c.b16 %v161, %v160
    %v173 = vpack.c.b16 %v163, %v162
    %v174 = vpack.c.b16 %v165, %v164
    %v175 = vpack.c.b16 %v167, %v166
    %184 = vmatpush.bf16.msra.mxu0 %v175
    %185 = vmatpush.bf16.msra.mxu0 %v174
    %186 = vmatpush.bf16.msra.mxu0 %v173
    %187 = vmatpush.bf16.msra.mxu0 %v172
    %188 = vmatpush.bf16.msra.mxu0 %v171
    %189 = vmatpush.bf16.msra.mxu0 %v170
    %190 = vmatpush.bf16.msra.mxu0 %v169
    %191 = vmatpush.bf16.msra.mxu0 %v168
    %192 = vmatmul.bf16.gmra.mxu0 %v115
    %v193 = vpop.f32.mrf.mxu0
    %v194 = vadd.f32 %v134, %v193
    %v195 = vpop.f32.mrf.mxu0
    %196 = vdwg.mxu0
    %v197 = vmax.f32 %v194, 0.0
    %v198 = vpack.c.bf16 %v197, %v197
    %v199 = vld [vmem:[#allocation8] sm:$0xf]
    %v200 = vld [vmem:[#allocation8 + $0x4] sm:$0xf]
    %v201 = vld [vmem:[#allocation8 + $0x8] sm:$0xf]
    %v202 = vld [vmem:[#allocation8 + $0xc] sm:$0xf]
    %v203 = vld [vmem:[#allocation8 + $0x10] sm:$0xf]
    %v204 = vld [vmem:[#allocation8 + $0x14] sm:$0xf]
    %v205 = vld [vmem:[#allocation8 + $0x18] sm:$0xf]
    %v206 = vld [vmem:[#allocation8 + $0x1c] sm:$0xf]
    %v207 = vld [vmem:[#allocation8 + $0x20] sm:$0xf]
    %v208 = vld [vmem:[#allocation8 + $0x24] sm:$0xf]
    %v209 = vld [vmem:[#allocation8 + $0x28] sm:$0xf]
    %v210 = vld [vmem:[#allocation8 + $0x2c] sm:$0xf]
    %v211 = vld [vmem:[#allocation8 + $0x30] sm:$0xf]
    %v212 = vld [vmem:[#allocation8 + $0x34] sm:$0xf]
    %v213 = vld [vmem:[#allocation8 + $0x38] sm:$0xf]
    %v214 = vld [vmem:[#allocation8 + $0x3c] sm:$0xf]
    %v215 = vld [vmem:[%s6] sm:$0x1]
    %v217 = vperm.slane %v215, 0
    %v235 = vunpack.c.l.b16 %v199
    %v236 = vunpack.c.l.b16 %v200
    %v237 = vunpack.c.l.b16 %v201
    %v238 = vunpack.c.l.b16 %v202
    %v239 = vunpack.c.l.b16 %v203
    %v240 = vunpack.c.l.b16 %v204
    %v241 = vunpack.c.l.b16 %v205
    %v242 = vunpack.c.l.b16 %v206
    %v243 = vunpack.c.l.b16 %v207
    %v244 = vunpack.c.l.b16 %v208
    %v245 = vunpack.c.l.b16 %v209
    %v246 = vunpack.c.l.b16 %v210
    %v247 = vunpack.c.l.b16 %v211
    %v248 = vunpack.c.l.b16 %v212
    %v249 = vunpack.c.l.b16 %v213
    %v250 = vunpack.c.l.b16 %v214
    %v251 = vpack.c.b16 %v236, %v235
    %v252 = vpack.c.b16 %v238, %v237
    %v253 = vpack.c.b16 %v240, %v239
    %v254 = vpack.c.b16 %v242, %v241
    %v255 = vpack.c.b16 %v244, %v243
    %v256 = vpack.c.b16 %v246, %v245
    %v257 = vpack.c.b16 %v248, %v247
    %v258 = vpack.c.b16 %v250, %v249
    %267 = vmatpush.bf16.msra.mxu0 %v258
    %268 = vmatpush.bf16.msra.mxu0 %v257
    %269 = vmatpush.bf16.msra.mxu0 %v256
    %270 = vmatpush.bf16.msra.mxu0 %v255
    %271 = vmatpush.bf16.msra.mxu0 %v254
    %272 = vmatpush.bf16.msra.mxu0 %v253
    %273 = vmatpush.bf16.msra.mxu0 %v252
    %274 = vmatpush.bf16.msra.mxu0 %v251
    %275 = vmatmul.bf16.gmra.mxu0 %v198
    %v276 = vpop.f32.mrf.mxu0
    %v277 = vadd.f32 %v217, %v276
    %v278 = vpop.f32.mrf.mxu0
    %279 = vdwg.mxu0
    %280 = vst [vmem:[#allocation10] sm:$0xff] %v277
    // Predicated region
    $region46: #{tpu_custom_call.1} parent=1 // pred_check
      _
    $region47: #{tpu_custom_call.1} parent=1 // pred_check_branch
      %282 = sbr.rel (0) target = $region49
    $region48: #{tpu_custom_call.1} parent=1 // pred_region
      %284 = vsyncadd [#allocation4], 0
      %s286 = sshll.u32 [#allocation10], 4
      %s287 = int_to_ptr.vmem [resolvable:$true] %s286
      %s288 = sshll.u32 %s7, 4
      %s289 = int_to_ptr.hbm [resolvable:$true] %s288
      %291 = dma.vmem_to_hbm [thread:$0]  %s287, 128, %s289, [#allocation4]
    $region49: #{tpu_custom_call.1} parent=1 // pred_fallthru
      _
    // Predicated region
    $region50: #{tpu_custom_call.1} parent=1 // pred_check
      _
    $region51: #{tpu_custom_call.1} parent=1 // pred_check_branch
      %293 = sbr.rel (0) target = $region53
    $region52: #{tpu_custom_call.1} parent=1 // pred_region
      %295 = dma.done [#allocation4], 128
    $region53: #{tpu_custom_call.1} parent=1 // pred_fallthru
      _
    %296 = vsyncpa [#allocation3], 1
    %297 = vsyncpa [#allocation6], 1
    %298 = vsyncpa [#allocation9], 1
    %299 = vsyncpa [#allocation4], 1

</llo_original>
